<compile_context>
chip_gen: v5e
topology: v5e:2x2
jax: 0.10.0
libtpu: 0.0.40
codegen_flags: <defaults>
</compile_context>

<pallas_src>
import functools

import jax
import jax.numpy as jnp
from jax.experimental import pallas as pl
from jax.experimental.pallas import tpu as pltpu

BN_EPS = 1e-5
LANES = 128


def _round_up(n, m):
    return ((n + m - 1) // m) * m


# ----------------------------- fused kernel -------------------------------- #
def _make_decoder_kernel(num_hidden_layers, batch):
    inv_b = 1.0 / float(batch)

    def _bn_relu(y, gamma, beta):
        # One-pass batch statistics: the two cross-sublane reductions are
        # independent (both can issue straight into the XLU slot).
        mean = jnp.sum(y, axis=0, keepdims=True) * inv_b            # (1, N)
        ex2 = jnp.sum(y * y, axis=0, keepdims=True) * inv_b         # (1, N)
        var = ex2 - mean * mean                                     # biased
        inv_std = jax.lax.rsqrt(var + BN_EPS)                       # EUP
        scale = gamma * inv_std                                     # (1, N)
        shift = beta - mean * scale                                 # (1, N)
        # Padded lanes: gamma == beta == 0 and y == 0  ->  stays exactly 0.
        return jnp.maximum(y * scale + shift, 0.0)

    def kernel(x_ref, w_in_ref, w_hid_ref, w_out_ref, gb_ref, b_out_ref, o_ref):
        gb = gb_ref[...]                       # (2*(1+L), HP): rows 2l / 2l+1

        # Input layer: Linear (bias dropped -- BN cancels it) -> BN -> ReLU.
        y = jnp.dot(x_ref[...].astype(jnp.bfloat16), w_in_ref[...],
                    preferred_element_type=jnp.float32)
        h = _bn_relu(y, gb[0:1, :], gb[1:2, :])

        # Hidden layers (statically unrolled).
        for i in range(num_hidden_layers):
            y = jnp.dot(h.astype(jnp.bfloat16), w_hid_ref[i],
                        preferred_element_type=jnp.float32)
            h = _bn_relu(y, gb[2 * (i + 1):2 * (i + 1) + 1, :],
                         gb[2 * (i + 1) + 1:2 * (i + 1) + 2, :])

        # Output Linear (keeps its bias).
        o_ref[...] = (jnp.dot(h.astype(jnp.bfloat16), w_out_ref[...],
                              preferred_element_type=jnp.float32)
                      + b_out_ref[...])

    return kernel


# ----------------------------- parameters ---------------------------------- #
def init_decoder_params(key, input_features, hidden_features, output_features,
                        num_hidden_layers):
    """Synthetic parameters matching the PyTorch module, pre-padded to
    lane-dense (multiple-of-128) feature dims.  Padded entries are exactly
    zero.  Weights are stored in bf16 (matmul operands); vectors stay f32.
    BN-fed Linear biases are omitted (exactly cancelled by BatchNorm)."""
    hp = _round_up(hidden_features, LANES)
    op = _round_up(output_features, LANES)

    def linear_weight(k, fan_in, fan_out, pad_in, pad_out):
        bound = 1.0 / float(fan_in) ** 0.5
        w = jax.random.uniform(k, (fan_in, fan_out), jnp.float32, -bound, bound)
        w_p = jnp.zeros((pad_in, pad_out), jnp.float32)
        w_p = w_p.at[:fan_in, :fan_out].set(w)
        return w_p.astype(jnp.bfloat16)

    keys = jax.random.split(key, num_hidden_layers + 3)

    # Input-layer weight: K dim left unpadded (full-array VMEM block).
    w_in = linear_weight(keys[0], input_features, hidden_features,
                         input_features, hp)

    # Hidden-layer weights stacked into one array (one DMA).
    n_hid = max(num_hidden_layers, 1)
    w_hid = jnp.zeros((n_hid, hp, hp), jnp.bfloat16)
    for i in range(num_hidden_layers):
        w_hid = w_hid.at[i].set(
            linear_weight(keys[1 + i], hidden_features, hidden_features, hp, hp))

    # Output layer: weight (bf16) + bias (f32, lane-padded with zeros).
    w_out = linear_weight(keys[num_hidden_layers + 1], hidden_features,
                          output_features, hp, op)
    bound = 1.0 / float(hidden_features) ** 0.5
    b_out = jax.random.uniform(keys[num_hidden_layers + 2], (output_features,),
                               jnp.float32, -bound, bound)
    b_out_p = jnp.zeros((1, op), jnp.float32).at[0, :output_features].set(b_out)

    # Stacked BN affine params: row 2l = gamma_l, row 2l+1 = beta_l.
    # PyTorch defaults: gamma=1, beta=0.  Padded lanes are exactly zero.
    gb = jnp.zeros((2 * (num_hidden_layers + 1), hp), jnp.float32)
    gb = gb.at[0::2, :hidden_features].set(1.0)

    return dict(w_in=w_in, w_hid=w_hid, w_out=w_out, gb=gb, b_out=b_out_p)


# ----------------------------- forward -------------------------------------- #
@functools.partial(jax.jit, static_argnums=(2, 3))
def decoder_forward(params, x, output_features, num_hidden_layers):
    batch = x.shape[0]
    op = params["w_out"].shape[1]

    vmem = pl.BlockSpec(memory_space=pltpu.MemorySpace.VMEM)
    out_padded = pl.pallas_call(
        _make_decoder_kernel(num_hidden_layers, batch),
        out_shape=jax.ShapeDtypeStruct((batch, op), jnp.float32),
        in_specs=[vmem] * 6,
        out_specs=vmem,
        # Tiny kernel: default scoped VMEM is plenty; raise for larger nets.
        compiler_params=pltpu.CompilerParams(vmem_limit_bytes=32 << 20),
    )(x, params["w_in"], params["w_hid"], params["w_out"],
      params["gb"], params["b_out"])

    return out_padded[:, :output_features]


# ----------------------------- reference ------------------------------------ #
def decoder_reference(params, x, output_features, num_hidden_layers):
    """Pure-JAX reference implementing the same math as the kernel
    (bf16 matmul operands, f32 accumulation, train-mode BatchNorm)."""
    def dot_bf16(a, w):
        return jnp.dot(a.astype(jnp.bfloat16), w,
                       preferred_element_type=jnp.float32)

    def bn_relu(y, gamma, beta):
        mean = jnp.mean(y, axis=0, keepdims=True)
        var = jnp.mean(y * y, axis=0, keepdims=True) - mean * mean
        y_hat = (y - mean) * jax.lax.rsqrt(var + BN_EPS)
        return jnp.maximum(y_hat * gamma + beta, 0.0)

    gb = params["gb"]
    h = bn_relu(dot_bf16(x, params["w_in"]), gb[0:1, :], gb[1:2, :])
    for i in range(num_hidden_layers):
        r = 2 * (i + 1)
        h = bn_relu(dot_bf16(h, params["w_hid"][i]),
                    gb[r:r + 1, :], gb[r + 1:r + 2, :])
    out = dot_bf16(h, params["w_out"]) + params["b_out"]
    return out[:, :output_features]


# ----------------------------- main ----------------------------------------- #
if __name__ == "__main__":
    input_features = 16
    hidden_features = 32
    output_features = 8
    num_hidden_layers = 2
    batch = 8

    key = jax.random.PRNGKey(0)
    k_params, k_x = jax.random.split(key)

    params = init_decoder_params(k_params, input_features, hidden_features,
                                 output_features, num_hidden_layers)
    x = jax.random.normal(k_x, (batch, input_features), jnp.float32)

    out = decoder_forward(params, x, output_features, num_hidden_layers)
    jax.block_until_ready(out)
    assert out.shape == (batch, output_features), out.shape

    ref = decoder_reference(params, x, output_features, num_hidden_layers)
    max_err = float(jnp.max(jnp.abs(out - ref)))
    assert jnp.allclose(out, ref, rtol=1e-2, atol=1e-2), max_err

    # TODO(synk): BatchNorm1d running_mean/running_var state updates (a
    # training side effect) are not produced; only the forward value is.
    print("KERNEL_OK")
</pallas_src>

<mosaic_0001>
module attributes {stable_mosaic.version = 11 : i64} {
  func.func @kernel(%arg0: memref<8x16xf32, #tpu.memory_space<vmem>>, %arg1: memref<16x128xbf16, #tpu.memory_space<vmem>>, %arg2: memref<2x128x128xbf16, #tpu.memory_space<vmem>>, %arg3: memref<128x128xbf16, #tpu.memory_space<vmem>>, %arg4: memref<6x128xf32, #tpu.memory_space<vmem>>, %arg5: memref<1x128xf32, #tpu.memory_space<vmem>>, %arg6: memref<8x128xf32, #tpu.memory_space<vmem>>) attributes {dimension_semantics = [], scalar_prefetch = 0 : i64, scratch_operands = 0 : i64, tpu.core_type = #tpu.core_type<tc>} {
    %c0 = arith.constant 0 : index
    %c0_0 = arith.constant 0 : index
    %0 = vector.load %arg4[%c0, %c0_0] : memref<6x128xf32, #tpu.memory_space<vmem>>, vector<6x128xf32>
    %c0_1 = arith.constant 0 : index
    %c0_2 = arith.constant 0 : index
    %1 = vector.load %arg0[%c0_1, %c0_2] : memref<8x16xf32, #tpu.memory_space<vmem>>, vector<8x16xf32>
    %2 = arith.truncf %1 : vector<8x16xf32> to vector<8x16xbf16>
    %c0_3 = arith.constant 0 : index
    %c0_4 = arith.constant 0 : index
    %3 = vector.load %arg1[%c0_3, %c0_4] : memref<16x128xbf16, #tpu.memory_space<vmem>>, vector<16x128xbf16>
    %cst = arith.constant dense<0.000000e+00> : vector<8x128xf32>
    %4 = tpu.matmul %2, %3, %cst {dimension_numbers = #tpu.dot_dimension_numbers<[1], [0], [0], [1], [0, 0, 1, 1], [], []>} : vector<8x16xbf16>, vector<16x128xbf16>, vector<8x128xf32> -> vector<8x128xf32>
    %5 = vector.extract_strided_slice %0 {offsets = [0, 0], sizes = [1, 128], strides = [1, 1]} : vector<6x128xf32> to vector<1x128xf32>
    %6 = vector.extract_strided_slice %0 {offsets = [1, 0], sizes = [1, 128], strides = [1, 1]} : vector<6x128xf32> to vector<1x128xf32>
    %cst_5 = arith.constant dense<0.000000e+00> : vector<128xf32>
    %7 = vector.multi_reduction <add>, %4, %cst_5 [0] : vector<8x128xf32> to vector<128xf32>
    %8 = vector.shape_cast %7 : vector<128xf32> to vector<1x128xf32>
    %cst_6 = arith.constant 1.250000e-01 : f32
    %9 = vector.broadcast %cst_6 : f32 to vector<1x128xf32>
    %10 = arith.mulf %8, %9 : vector<1x128xf32>
    %11 = arith.mulf %4, %4 : vector<8x128xf32>
    %cst_7 = arith.constant dense<0.000000e+00> : vector<128xf32>
    %12 = vector.multi_reduction <add>, %11, %cst_7 [0] : vector<8x128xf32> to vector<128xf32>
    %13 = vector.shape_cast %12 : vector<128xf32> to vector<1x128xf32>
    %cst_8 = arith.constant 1.250000e-01 : f32
    %14 = vector.broadcast %cst_8 : f32 to vector<1x128xf32>
    %15 = arith.mulf %13, %14 : vector<1x128xf32>
    %16 = arith.mulf %10, %10 : vector<1x128xf32>
    %17 = arith.subf %15, %16 : vector<1x128xf32>
    %cst_9 = arith.constant 9.99999974E-6 : f32
    %18 = vector.broadcast %cst_9 : f32 to vector<1x128xf32>
    %19 = arith.addf %17, %18 : vector<1x128xf32>
    %20 = math.rsqrt %19 : vector<1x128xf32>
    %21 = arith.mulf %5, %20 : vector<1x128xf32>
    %22 = arith.mulf %10, %21 : vector<1x128xf32>
    %23 = arith.subf %6, %22 : vector<1x128xf32>
    %24 = vector.broadcast %21 : vector<1x128xf32> to vector<8x128xf32>
    %25 = arith.mulf %4, %24 : vector<8x128xf32>
    %26 = vector.broadcast %23 : vector<1x128xf32> to vector<8x128xf32>
    %27 = arith.addf %25, %26 : vector<8x128xf32>
    %cst_10 = arith.constant 0.000000e+00 : f32
    %28 = vector.broadcast %cst_10 : f32 to vector<8x128xf32>
    %29 = arith.maximumf %27, %28 : vector<8x128xf32>
    %30 = arith.truncf %29 : vector<8x128xf32> to vector<8x128xbf16>
    %c0_11 = arith.constant 0 : index
    %c0_12 = arith.constant 0 : index
    %c0_13 = arith.constant 0 : index
    %31 = vector.load %arg2[%c0_11, %c0_12, %c0_13] : memref<2x128x128xbf16, #tpu.memory_space<vmem>>, vector<1x128x128xbf16>
    %32 = vector.shape_cast %31 : vector<1x128x128xbf16> to vector<128x128xbf16>
    %cst_14 = arith.constant dense<0.000000e+00> : vector<8x128xf32>
    %33 = tpu.matmul %30, %32, %cst_14 {dimension_numbers = #tpu.dot_dimension_numbers<[1], [0], [0], [1], [0, 0, 1, 1], [], []>} : vector<8x128xbf16>, vector<128x128xbf16>, vector<8x128xf32> -> vector<8x128xf32>
    %34 = vector.extract_strided_slice %0 {offsets = [2, 0], sizes = [1, 128], strides = [1, 1]} : vector<6x128xf32> to vector<1x128xf32>
    %35 = vector.extract_strided_slice %0 {offsets = [3, 0], sizes = [1, 128], strides = [1, 1]} : vector<6x128xf32> to vector<1x128xf32>
    %cst_15 = arith.constant dense<0.000000e+00> : vector<128xf32>
    %36 = vector.multi_reduction <add>, %33, %cst_15 [0] : vector<8x128xf32> to vector<128xf32>
    %37 = vector.shape_cast %36 : vector<128xf32> to vector<1x128xf32>
    %cst_16 = arith.constant 1.250000e-01 : f32
    %38 = vector.broadcast %cst_16 : f32 to vector<1x128xf32>
    %39 = arith.mulf %37, %38 : vector<1x128xf32>
    %40 = arith.mulf %33, %33 : vector<8x128xf32>
    %cst_17 = arith.constant dense<0.000000e+00> : vector<128xf32>
    %41 = vector.multi_reduction <add>, %40, %cst_17 [0] : vector<8x128xf32> to vector<128xf32>
    %42 = vector.shape_cast %41 : vector<128xf32> to vector<1x128xf32>
    %cst_18 = arith.constant 1.250000e-01 : f32
    %43 = vector.broadcast %cst_18 : f32 to vector<1x128xf32>
    %44 = arith.mulf %42, %43 : vector<1x128xf32>
    %45 = arith.mulf %39, %39 : vector<1x128xf32>
    %46 = arith.subf %44, %45 : vector<1x128xf32>
    %cst_19 = arith.constant 9.99999974E-6 : f32
    %47 = vector.broadcast %cst_19 : f32 to vector<1x128xf32>
    %48 = arith.addf %46, %47 : vector<1x128xf32>
    %49 = math.rsqrt %48 : vector<1x128xf32>
    %50 = arith.mulf %34, %49 : vector<1x128xf32>
    %51 = arith.mulf %39, %50 : vector<1x128xf32>
    %52 = arith.subf %35, %51 : vector<1x128xf32>
    %53 = vector.broadcast %50 : vector<1x128xf32> to vector<8x128xf32>
    %54 = arith.mulf %33, %53 : vector<8x128xf32>
    %55 = vector.broadcast %52 : vector<1x128xf32> to vector<8x128xf32>
    %56 = arith.addf %54, %55 : vector<8x128xf32>
    %cst_20 = arith.constant 0.000000e+00 : f32
    %57 = vector.broadcast %cst_20 : f32 to vector<8x128xf32>
    %58 = arith.maximumf %56, %57 : vector<8x128xf32>
    %59 = arith.truncf %58 : vector<8x128xf32> to vector<8x128xbf16>
    %c1 = arith.constant 1 : index
    %c0_21 = arith.constant 0 : index
    %c0_22 = arith.constant 0 : index
    %60 = vector.load %arg2[%c1, %c0_21, %c0_22] : memref<2x128x128xbf16, #tpu.memory_space<vmem>>, vector<1x128x128xbf16>
    %61 = vector.shape_cast %60 : vector<1x128x128xbf16> to vector<128x128xbf16>
    %cst_23 = arith.constant dense<0.000000e+00> : vector<8x128xf32>
    %62 = tpu.matmul %59, %61, %cst_23 {dimension_numbers = #tpu.dot_dimension_numbers<[1], [0], [0], [1], [0, 0, 1, 1], [], []>} : vector<8x128xbf16>, vector<128x128xbf16>, vector<8x128xf32> -> vector<8x128xf32>
    %63 = vector.extract_strided_slice %0 {offsets = [4, 0], sizes = [1, 128], strides = [1, 1]} : vector<6x128xf32> to vector<1x128xf32>
    %64 = vector.extract_strided_slice %0 {offsets = [5, 0], sizes = [1, 128], strides = [1, 1]} : vector<6x128xf32> to vector<1x128xf32>
    %cst_24 = arith.constant dense<0.000000e+00> : vector<128xf32>
    %65 = vector.multi_reduction <add>, %62, %cst_24 [0] : vector<8x128xf32> to vector<128xf32>
    %66 = vector.shape_cast %65 : vector<128xf32> to vector<1x128xf32>
    %cst_25 = arith.constant 1.250000e-01 : f32
    %67 = vector.broadcast %cst_25 : f32 to vector<1x128xf32>
    %68 = arith.mulf %66, %67 : vector<1x128xf32>
    %69 = arith.mulf %62, %62 : vector<8x128xf32>
    %cst_26 = arith.constant dense<0.000000e+00> : vector<128xf32>
    %70 = vector.multi_reduction <add>, %69, %cst_26 [0] : vector<8x128xf32> to vector<128xf32>
    %71 = vector.shape_cast %70 : vector<128xf32> to vector<1x128xf32>
    %cst_27 = arith.constant 1.250000e-01 : f32
    %72 = vector.broadcast %cst_27 : f32 to vector<1x128xf32>
    %73 = arith.mulf %71, %72 : vector<1x128xf32>
    %74 = arith.mulf %68, %68 : vector<1x128xf32>
    %75 = arith.subf %73, %74 : vector<1x128xf32>
    %cst_28 = arith.constant 9.99999974E-6 : f32
    %76 = vector.broadcast %cst_28 : f32 to vector<1x128xf32>
    %77 = arith.addf %75, %76 : vector<1x128xf32>
    %78 = math.rsqrt %77 : vector<1x128xf32>
    %79 = arith.mulf %63, %78 : vector<1x128xf32>
    %80 = arith.mulf %68, %79 : vector<1x128xf32>
    %81 = arith.subf %64, %80 : vector<1x128xf32>
    %82 = vector.broadcast %79 : vector<1x128xf32> to vector<8x128xf32>
    %83 = arith.mulf %62, %82 : vector<8x128xf32>
    %84 = vector.broadcast %81 : vector<1x128xf32> to vector<8x128xf32>
    %85 = arith.addf %83, %84 : vector<8x128xf32>
    %cst_29 = arith.constant 0.000000e+00 : f32
    %86 = vector.broadcast %cst_29 : f32 to vector<8x128xf32>
    %87 = arith.maximumf %85, %86 : vector<8x128xf32>
    %88 = arith.truncf %87 : vector<8x128xf32> to vector<8x128xbf16>
    %c0_30 = arith.constant 0 : index
    %c0_31 = arith.constant 0 : index
    %89 = vector.load %arg3[%c0_30, %c0_31] : memref<128x128xbf16, #tpu.memory_space<vmem>>, vector<128x128xbf16>
    %cst_32 = arith.constant dense<0.000000e+00> : vector<8x128xf32>
    %90 = tpu.matmul %88, %89, %cst_32 {dimension_numbers = #tpu.dot_dimension_numbers<[1], [0], [0], [1], [0, 0, 1, 1], [], []>} : vector<8x128xbf16>, vector<128x128xbf16>, vector<8x128xf32> -> vector<8x128xf32>
    %c0_33 = arith.constant 0 : index
    %c0_34 = arith.constant 0 : index
    %91 = vector.load %arg5[%c0_33, %c0_34] : memref<1x128xf32, #tpu.memory_space<vmem>>, vector<1x128xf32>
    %92 = vector.broadcast %91 : vector<1x128xf32> to vector<8x128xf32>
    %93 = arith.addf %90, %92 : vector<8x128xf32>
    %c0_35 = arith.constant 0 : index
    %c0_36 = arith.constant 0 : index
    %94 = vector.load %arg6[%c0_35, %c0_36] : memref<8x128xf32, #tpu.memory_space<vmem>>, vector<8x128xf32>
    tpu.vector_store %arg6[%c0_35, %c0_36], %93 {strides = array<i32>} : memref<8x128xf32, #tpu.memory_space<vmem>>, vector<8x128xf32>,
    return
  }
}

</mosaic_0001>

<llo_original>
// kernel: decoder_forward.1
$region0: #{decoder_forward.1}
  #allocation0 [shape = 'u32[]', space=smem, size = 0x4, offset = 0x4, fixed_abs, tag = 'smem constant byte address 0x4 - core index']
  #allocation1 [shape = 'u32[72,128]{1,0:T(1,128)}', space=vmem, size = 0x9000, scoped, tag = 'internal scratch']
  %s0 = inlined_call_operand.hbm [shape: f32[8,16], index: 0, kind: input, shape index: {}]
  %s1 = inlined_call_operand.hbm [shape: bf16[16,128], index: 1, kind: input, shape index: {}]
  %s2 = inlined_call_operand.hbm [shape: bf16[2,128,128], index: 2, kind: input, shape index: {}]
  %s3 = inlined_call_operand.hbm [shape: bf16[128,128], index: 3, kind: input, shape index: {}]
  %s4 = inlined_call_operand.hbm [shape: f32[6,128], index: 4, kind: input, shape index: {}]
  %s5 = inlined_call_operand.hbm [shape: f32[1,128], index: 5, kind: input, shape index: {}]
  %s6 = inlined_call_operand.hbm [shape: f32[8,128], index: 6, kind: output, shape index: {}]
  %s7 = sld [smem:[#allocation0]]
  $region58: #{decoder_forward.1} parent=0
    _
  %s9 = ssub.s32 1, %s7
  %s10 = scalar_select 0, %s9, %s7
  $region1: #{decoder_forward.1} parent=0
    #allocation2 [shape = 'u8[4096]{0}', space=vmem, size = 0x1000, scoped, tag = 'input window, operand 0, single buffered']
    #allocation3 [shape = 's32[1]{0}', space=sflag, size = 0x4, scoped, tag = 'scoped memory for decoder_forward.1']
    #allocation4 [shape = 's32[1]{0}', space=sflag, size = 0x4, scoped, tag = 'scoped memory for decoder_forward.1']
    #allocation5 [shape = 'u8[4096]{0}', space=vmem, size = 0x1000, scoped, tag = 'input window, operand 1, single buffered']
    #allocation6 [shape = 's32[1]{0}', space=sflag, size = 0x4, scoped, tag = 'scoped memory for decoder_forward.1']
    #allocation7 [shape = 'u8[65536]{0}', space=vmem, size = 0x10000, scoped, tag = 'input window, operand 2, single buffered']
    #allocation8 [shape = 'u8[32768]{0}', space=vmem, size = 0x8000, scoped, tag = 'input window, operand 3, single buffered']
    #allocation9 [shape = 's32[1]{0}', space=sflag, size = 0x4, scoped, tag = 'scoped memory for decoder_forward.1']
    #allocation10 [shape = 'u8[4096]{0}', space=vmem, size = 0x1000, scoped, tag = 'input window, operand 4, single buffered']
    #allocation11 [shape = 'u8[512]{0}', space=vmem, size = 0x400, scoped, tag = 'input window, operand 5, single buffered']
    #allocation12 [shape = 's32[1]{0}', space=sflag, size = 0x4, scoped, tag = 'scoped memory for decoder_forward.1']
    #allocation13 [shape = 'u8[4096]{0}', space=vmem, size = 0x1000, scoped, tag = 'output window, operand 0, single buffered']
    %11 = vsyncpa [#allocation3], 0
    %12 = vsyncpa [#allocation6], 0
    %13 = vsyncpa [#allocation9], 0
    %14 = vsyncpa [#allocation12], 0
    %15 = vsyncpa [#allocation4], 0
    // Predicated region
    $region2: #{decoder_forward.1} parent=1 // pred_check
      _
    $region3: #{decoder_forward.1} parent=1 // pred_check_branch
      %17 = sbr.rel (0) target = $region5
    $region4: #{decoder_forward.1} parent=1 // pred_region
      %19 = vsyncadd [#allocation3], 0
      %s21 = sshll.u32 %s0, 4
      %s22 = int_to_ptr.hbm [resolvable:$true] %s21
      %s23 = sshll.u32 [#allocation2], 4
      %s24 = int_to_ptr.vmem [resolvable:$true] %s23
      %26 = dma.hbm_to_vmem [thread:$0]  %s22, 128, %s24, [#allocation3]
    $region5: #{decoder_forward.1} parent=1 // pred_fallthru
      _
    // Predicated region
    $region6: #{decoder_forward.1} parent=1 // pred_check
      _
    $region7: #{decoder_forward.1} parent=1 // pred_check_branch
      %28 = sbr.rel (0) target = $region9
    $region8: #{decoder_forward.1} parent=1 // pred_region
      %30 = vsyncadd [#allocation6], 0
      %s31 = sshll.u32 %s1, 4
      %s32 = int_to_ptr.hbm [resolvable:$true] %s31
      %s33 = sshll.u32 [#allocation5], 4
      %s34 = int_to_ptr.vmem [resolvable:$true] %s33
      %39 = dma.hbm_to_vmem [thread:$0]  %s32, 128, %s34, [#allocation6], 64, 64, 4
    $region9: #{decoder_forward.1} parent=1 // pred_fallthru
      _
    // Predicated region
    $region10: #{decoder_forward.1} parent=1 // pred_check
      _
    $region11: #{decoder_forward.1} parent=1 // pred_check_branch
      %41 = sbr.rel (0) target = $region13
    $region12: #{decoder_forward.1} parent=1 // pred_region
      %43 = vsyncadd [#allocation6], 0
      %s44 = sshll.u32 %s2, 4
      %s45 = int_to_ptr.hbm [resolvable:$true] %s44
      %s46 = sshll.u32 [#allocation7], 4
      %s47 = int_to_ptr.vmem [resolvable:$true] %s46
      %52 = dma.hbm_to_vmem [thread:$0]  %s45, 2048, %s47, [#allocation6], 64, 64, 4
    $region13: #{decoder_forward.1} parent=1 // pred_fallthru
      _
    // Predicated region
    $region14: #{decoder_forward.1} parent=1 // pred_check
      _
    $region15: #{decoder_forward.1} parent=1 // pred_check_branch
      %54 = sbr.rel (0) target = $region17
    $region16: #{decoder_forward.1} parent=1 // pred_region
      %56 = vsyncadd [#allocation9], 0
      %s57 = sshll.u32 %s3, 4
      %s58 = int_to_ptr.hbm [resolvable:$true] %s57
      %s59 = sshll.u32 [#allocation8], 4
      %s60 = int_to_ptr.vmem [resolvable:$true] %s59
      %65 = dma.hbm_to_vmem [thread:$0]  %s58, 1024, %s60, [#allocation9], 64, 64, 4
    $region17: #{decoder_forward.1} parent=1 // pred_fallthru
      _
    // Predicated region
    $region18: #{decoder_forward.1} parent=1 // pred_check
      _
    $region19: #{decoder_forward.1} parent=1 // pred_check_branch
      %67 = sbr.rel (0) target = $region21
    $region20: #{decoder_forward.1} parent=1 // pred_region
      %69 = vsyncadd [#allocation9], 0
      %s71 = sshll.u32 %s4, 4
      %s72 = int_to_ptr.hbm [resolvable:$true] %s71
      %s73 = sshll.u32 [#allocation10], 4
      %s74 = int_to_ptr.vmem [resolvable:$true] %s73
      %76 = dma.hbm_to_vmem [thread:$0]  %s72, 128, %s74, [#allocation9]
    $region21: #{decoder_forward.1} parent=1 // pred_fallthru
      _
    // Predicated region
    $region22: #{decoder_forward.1} parent=1 // pred_check
      _
    $region23: #{decoder_forward.1} parent=1 // pred_check_branch
      %78 = sbr.rel (0) target = $region25
    $region24: #{decoder_forward.1} parent=1 // pred_region
      %80 = vsyncadd [#allocation12], 0
      %s82 = sshll.u32 %s5, 4
      %s83 = int_to_ptr.hbm [resolvable:$true] %s82
      %s84 = sshll.u32 [#allocation11], 4
      %s85 = int_to_ptr.vmem [resolvable:$true] %s84
      %87 = dma.hbm_to_vmem [thread:$0]  %s83, 16, %s85, [#allocation12]
    $region25: #{decoder_forward.1} parent=1 // pred_fallthru
      _
    // Predicated region
    $region26: #{decoder_forward.1} parent=1 // pred_check
      _
    $region27: #{decoder_forward.1} parent=1 // pred_check_branch
      %89 = sbr.rel (0) target = $region29
    $region28: #{decoder_forward.1} parent=1 // pred_region
      %91 = dma.done [#allocation3], 128
    $region29: #{decoder_forward.1} parent=1 // pred_fallthru
      _
    // Predicated region
    $region30: #{decoder_forward.1} parent=1 // pred_check
      _
    $region31: #{decoder_forward.1} parent=1 // pred_check_branch
      %93 = sbr.rel (0) target = $region33
    $region32: #{decoder_forward.1} parent=1 // pred_region
      %95 = dma.done [#allocation6], 128
    $region33: #{decoder_forward.1} parent=1 // pred_fallthru
      _
    // Predicated region
    $region34: #{decoder_forward.1} parent=1 // pred_check
      _
    $region35: #{decoder_forward.1} parent=1 // pred_check_branch
      %97 = sbr.rel (0) target = $region37
    $region36: #{decoder_forward.1} parent=1 // pred_region
      %99 = dma.done [#allocation6], 2048
    $region37: #{decoder_forward.1} parent=1 // pred_fallthru
      _
    // Predicated region
    $region38: #{decoder_forward.1} parent=1 // pred_check
      _
    $region39: #{decoder_forward.1} parent=1 // pred_check_branch
      %101 = sbr.rel (0) target = $region41
    $region40: #{decoder_forward.1} parent=1 // pred_region
      %103 = dma.done [#allocation9], 1024
    $region41: #{decoder_forward.1} parent=1 // pred_fallthru
      _
    // Predicated region
    $region42: #{decoder_forward.1} parent=1 // pred_check
      _
    $region43: #{decoder_forward.1} parent=1 // pred_check_branch
      %105 = sbr.rel (0) target = $region45
    $region44: #{decoder_forward.1} parent=1 // pred_region
      %107 = dma.done [#allocation9], 128
    $region45: #{decoder_forward.1} parent=1 // pred_fallthru
      _
    // Predicated region
    $region46: #{decoder_forward.1} parent=1 // pred_check
      _
    $region47: #{decoder_forward.1} parent=1 // pred_check_branch
      %109 = sbr.rel (0) target = $region49
    $region48: #{decoder_forward.1} parent=1 // pred_region
      %111 = dma.done [#allocation12], 16
    $region49: #{decoder_forward.1} parent=1 // pred_fallthru
      _
    %v113 = vld [vmem:[#allocation10] sm:$0x3f]
    %v114 = vld [vmem:[#allocation2] sm:$0xff]
    %v115 = vpack.c.bf16 %v114, %v114
    %v116 = vld [vmem:[#allocation5] sm:$0xf]
    %v117 = vld [vmem:[#allocation5 + $0x4] sm:$0xf]
    %v120 = vunpack.c.l.b16 %v116
    %v121 = vunpack.c.l.b16 %v117
    %v122 = vpack.c.b16 %v121, %v120
    %vm124 = vcmask 130048
    %v126 = vsel %vm124, %v115, 0
    %128 = vmatpush.bf16.msra.mxu0 0
    %129 = vmatpush.bf16.msra.mxu0 0
    %130 = vmatpush.bf16.msra.mxu0 0
    %131 = vmatpush.bf16.msra.mxu0 0
    %132 = vmatpush.bf16.msra.mxu0 0
    %133 = vmatpush.bf16.msra.mxu0 0
    %134 = vmatpush.bf16.msra.mxu0 0
    %135 = vmatpush.bf16.msra.mxu0 %v122
    %136 = vmatmul.bf16.gmra.mxu0 %v126
    %v137 = vpop.f32.mrf.mxu0
    %v138 = vadd.f32 0.0, %v137
    %v139 = vpop.f32.mrf.mxu0
    %140 = vdwg.mxu0
    %v141 = vrot.slane %v138, 4
    %v142 = vadd.f32 %v138, %v141
    %v143 = vrot.slane %v142, 2
    %v144 = vadd.f32 %v142, %v143
    %v145 = vrot.slane %v144, 1
    %v146 = vadd.f32 %v144, %v145
    %v147 = vmul.f32 %v146, 0.125
    %v148 = vmul.f32 %v138, %v138
    %v149 = vrot.slane %v148, 4
    %v150 = vadd.f32 %v148, %v149
    %v151 = vrot.slane %v150, 2
    %v152 = vadd.f32 %v150, %v151
    %v153 = vrot.slane %v152, 1
    %v154 = vadd.f32 %v152, %v153
    %v155 = vmul.f32 %v154, 0.125
    %v156 = vmul.f32 %v147, %v147
    %v157 = vsub.f32 %v155, %v156
    %v158 = vadd.f32 %v157, 1e-05
    %v159 = vrsqrt.pop %v158
    %v160 = vmul.f32 %v159, %v158
    %v161 = vmul.f32 %v160, %v159
    %v162 = vmul.f32 0.5, %v161
    %v163 = vsub.f32 1.5, %v162
    %v164 = vmul.f32 %v159, %v163
    %vm165 = vweird.f32 %v158
    %vm166 = vweird.f32 %v159
    %vm167 = vmor %vm165, %vm166
    %v168 = vsel %vm167, %v159, %v164
    %v169 = vmul.f32 %v113, %v168
    %v170 = vmul.f32 %v147, %v169
    %v172 = vrot.slane %v170, 7
    %v174 = vsub.f32 %v113, %v172
    %v175 = vperm.slane %v169, 0
    %v176 = vmul.f32 %v138, %v175
    %v177 = vperm.slane %v174, 1
    %v178 = vadd.f32 %v176, %v177
    %v179 = vmax.f32 %v178, 0.0
    %v180 = vpack.c.bf16 %v179, %v179
    %v181 = vld [vmem:[#allocation7] sm:$0xf]
    %v182 = vld [vmem:[#allocation7 + $0x4] sm:$0xf]
    %v183 = vld [vmem:[#allocation7 + $0x8] sm:$0xf]
    %v184 = vld [vmem:[#allocation7 + $0xc] sm:$0xf]
    %v185 = vld [vmem:[#allocation7 + $0x10] sm:$0xf]
    %v186 = vld [vmem:[#allocation7 + $0x14] sm:$0xf]
    %v187 = vld [vmem:[#allocation7 + $0x18] sm:$0xf]
    %v188 = vld [vmem:[#allocation7 + $0x1c] sm:$0xf]
    %v189 = vld [vmem:[#allocation7 + $0x20] sm:$0xf]
    %v190 = vld [vmem:[#allocation7 + $0x24] sm:$0xf]
    %v191 = vld [vmem:[#allocation7 + $0x28] sm:$0xf]
    %v192 = vld [vmem:[#allocation7 + $0x2c] sm:$0xf]
    %v193 = vld [vmem:[#allocation7 + $0x30] sm:$0xf]
    %v194 = vld [vmem:[#allocation7 + $0x34] sm:$0xf]
    %v195 = vld [vmem:[#allocation7 + $0x38] sm:$0xf]
    %v196 = vld [vmem:[#allocation7 + $0x3c] sm:$0xf]
    %v213 = vunpack.c.l.b16 %v181
    %v214 = vunpack.c.l.b16 %v182
    %v215 = vunpack.c.l.b16 %v183
    %v216 = vunpack.c.l.b16 %v184
    %v217 = vunpack.c.l.b16 %v185
    %v218 = vunpack.c.l.b16 %v186
    %v219 = vunpack.c.l.b16 %v187
    %v220 = vunpack.c.l.b16 %v188
    %v221 = vunpack.c.l.b16 %v189
    %v222 = vunpack.c.l.b16 %v190
    %v223 = vunpack.c.l.b16 %v191
    %v224 = vunpack.c.l.b16 %v192
    %v225 = vunpack.c.l.b16 %v193
    %v226 = vunpack.c.l.b16 %v194
    %v227 = vunpack.c.l.b16 %v195
    %v228 = vunpack.c.l.b16 %v196
    %v229 = vpack.c.b16 %v214, %v213
    %v230 = vpack.c.b16 %v216, %v215
    %v231 = vpack.c.b16 %v218, %v217
    %v232 = vpack.c.b16 %v220, %v219
    %v233 = vpack.c.b16 %v222, %v221
    %v234 = vpack.c.b16 %v224, %v223
    %v235 = vpack.c.b16 %v226, %v225
    %v236 = vpack.c.b16 %v228, %v227
    %245 = vmatpush.bf16.msra.mxu0 %v236
    %246 = vmatpush.bf16.msra.mxu0 %v235
    %247 = vmatpush.bf16.msra.mxu0 %v234
    %248 = vmatpush.bf16.msra.mxu0 %v233
    %249 = vmatpush.bf16.msra.mxu0 %v232
    %250 = vmatpush.bf16.msra.mxu0 %v231
    %251 = vmatpush.bf16.msra.mxu0 %v230
    %252 = vmatpush.bf16.msra.mxu0 %v229
    %253 = vmatmul.bf16.gmra.mxu0 %v180
    %v254 = vpop.f32.mrf.mxu0
    %v255 = vadd.f32 0.0, %v254
    %v256 = vpop.f32.mrf.mxu0
    %257 = vdwg.mxu0
    %v258 = vrot.slane %v255, 4
    %v259 = vadd.f32 %v255, %v258
    %v260 = vrot.slane %v259, 2
    %v261 = vadd.f32 %v259, %v260
    %v262 = vrot.slane %v261, 1
    %v263 = vadd.f32 %v261, %v262
    %v264 = vmul.f32 %v263, 0.125
    %v265 = vmul.f32 %v255, %v255
    %v266 = vrot.slane %v265, 4
    %v267 = vadd.f32 %v265, %v266
    %v268 = vrot.slane %v267, 2
    %v269 = vadd.f32 %v267, %v268
    %v270 = vrot.slane %v269, 1
    %v271 = vadd.f32 %v269, %v270
    %v272 = vmul.f32 %v271, 0.125
    %v273 = vmul.f32 %v264, %v264
    %v274 = vsub.f32 %v272, %v273
    %v275 = vadd.f32 %v274, 1e-05
    %v276 = vrsqrt.pop %v275
    %v277 = vmul.f32 %v276, %v275
    %v278 = vmul.f32 %v277, %v276
    %v279 = vmul.f32 0.5, %v278
    %v280 = vsub.f32 1.5, %v279
    %v281 = vmul.f32 %v276, %v280
    %vm282 = vweird.f32 %v275
    %vm283 = vweird.f32 %v276
    %vm284 = vmor %vm282, %vm283
    %v285 = vsel %vm284, %v276, %v281
    %v286 = vmul.f32 %v113, %v285
    %v287 = vmul.f32 %v264, %v286
    %v289 = vrot.slane %v287, 7
    %v291 = vsub.f32 %v113, %v289
    %v292 = vperm.slane %v286, 2
    %v293 = vmul.f32 %v255, %v292
    %v294 = vperm.slane %v291, 3
    %v295 = vadd.f32 %v293, %v294
    %v296 = vmax.f32 %v295, 0.0
    %v297 = vpack.c.bf16 %v296, %v296
    %s298 = scalar_lea.vmem [#allocation7], 64
    %v299 = vld [vmem:[%s298] sm:$0xf]
    %v300 = vld [vmem:[%s298 + $0x4] sm:$0xf]
    %v301 = vld [vmem:[%s298 + $0x8] sm:$0xf]
    %v302 = vld [vmem:[%s298 + $0xc] sm:$0xf]
    %v303 = vld [vmem:[%s298 + $0x10] sm:$0xf]
    %v304 = vld [vmem:[%s298 + $0x14] sm:$0xf]
    %v305 = vld [vmem:[%s298 + $0x18] sm:$0xf]
    %v306 = vld [vmem:[%s298 + $0x1c] sm:$0xf]
    %v307 = vld [vmem:[%s298 + $0x20] sm:$0xf]
    %v308 = vld [vmem:[%s298 + $0x24] sm:$0xf]
    %v309 = vld [vmem:[%s298 + $0x28] sm:$0xf]
    %v310 = vld [vmem:[%s298 + $0x2c] sm:$0xf]
    %v311 = vld [vmem:[%s298 + $0x30] sm:$0xf]
    %v312 = vld [vmem:[%s298 + $0x34] sm:$0xf]
    %v313 = vld [vmem:[%s298 + $0x38] sm:$0xf]
    %v314 = vld [vmem:[%s298 + $0x3c] sm:$0xf]
    %v331 = vunpack.c.l.b16 %v299
    %v332 = vunpack.c.l.b16 %v300
    %v333 = vunpack.c.l.b16 %v301
    %v334 = vunpack.c.l.b16 %v302
    %v335 = vunpack.c.l.b16 %v303
    %v336 = vunpack.c.l.b16 %v304
    %v337 = vunpack.c.l.b16 %v305
    %v338 = vunpack.c.l.b16 %v306
    %v339 = vunpack.c.l.b16 %v307
    %v340 = vunpack.c.l.b16 %v308
    %v341 = vunpack.c.l.b16 %v309
    %v342 = vunpack.c.l.b16 %v310
    %v343 = vunpack.c.l.b16 %v311
    %v344 = vunpack.c.l.b16 %v312
    %v345 = vunpack.c.l.b16 %v313
    %v346 = vunpack.c.l.b16 %v314
    %v347 = vpack.c.b16 %v332, %v331
    %v348 = vpack.c.b16 %v334, %v333
    %v349 = vpack.c.b16 %v336, %v335
    %v350 = vpack.c.b16 %v338, %v337
    %v351 = vpack.c.b16 %v340, %v339
    %v352 = vpack.c.b16 %v342, %v341
    %v353 = vpack.c.b16 %v344, %v343
    %v354 = vpack.c.b16 %v346, %v345
    %363 = vmatpush.bf16.msra.mxu0 %v354
    %364 = vmatpush.bf16.msra.mxu0 %v353
    %365 = vmatpush.bf16.msra.mxu0 %v352
    %366 = vmatpush.bf16.msra.mxu0 %v351
    %367 = vmatpush.bf16.msra.mxu0 %v350
    %368 = vmatpush.bf16.msra.mxu0 %v349
    %369 = vmatpush.bf16.msra.mxu0 %v348
    %370 = vmatpush.bf16.msra.mxu0 %v347
    %371 = vmatmul.bf16.gmra.mxu0 %v297
    %v372 = vpop.f32.mrf.mxu0
    %v373 = vadd.f32 0.0, %v372
    %v374 = vpop.f32.mrf.mxu0
    %375 = vdwg.mxu0
    %v376 = vrot.slane %v373, 4
    %v377 = vadd.f32 %v373, %v376
    %v378 = vrot.slane %v377, 2
    %v379 = vadd.f32 %v377, %v378
    %v380 = vrot.slane %v379, 1
    %v381 = vadd.f32 %v379, %v380
    %v382 = vmul.f32 %v381, 0.125
    %v383 = vmul.f32 %v373, %v373
    %v384 = vrot.slane %v383, 4
    %v385 = vadd.f32 %v383, %v384
    %v386 = vrot.slane %v385, 2
    %v387 = vadd.f32 %v385, %v386
    %v388 = vrot.slane %v387, 1
    %v389 = vadd.f32 %v387, %v388
    %v390 = vmul.f32 %v389, 0.125
    %v391 = vmul.f32 %v382, %v382
    %v392 = vsub.f32 %v390, %v391
    %v393 = vadd.f32 %v392, 1e-05
    %v394 = vrsqrt.pop %v393
    %v395 = vmul.f32 %v394, %v393
    %v396 = vmul.f32 %v395, %v394
    %v397 = vmul.f32 0.5, %v396
    %v398 = vsub.f32 1.5, %v397
    %v399 = vmul.f32 %v394, %v398
    %vm400 = vweird.f32 %v393
    %vm401 = vweird.f32 %v394
    %vm402 = vmor %vm400, %vm401
    %v403 = vsel %vm402, %v394, %v399
    %v404 = vmul.f32 %v113, %v403
    %v405 = vmul.f32 %v382, %v404
    %v407 = vrot.slane %v405, 7
    %v409 = vsub.f32 %v113, %v407
    %v410 = vperm.slane %v404, 4
    %v411 = vmul.f32 %v373, %v410
    %v412 = vperm.slane %v409, 5
    %v413 = vadd.f32 %v411, %v412
    %v414 = vmax.f32 %v413, 0.0
    %v415 = vpack.c.bf16 %v414, %v414
    %v416 = vld [vmem:[#allocation8] sm:$0xf]
    %v417 = vld [vmem:[#allocation8 + $0x4] sm:$0xf]
    %v418 = vld [vmem:[#allocation8 + $0x8] sm:$0xf]
    %v419 = vld [vmem:[#allocation8 + $0xc] sm:$0xf]
    %v420 = vld [vmem:[#allocation8 + $0x10] sm:$0xf]
    %v421 = vld [vmem:[#allocation8 + $0x14] sm:$0xf]
    %v422 = vld [vmem:[#allocation8 + $0x18] sm:$0xf]
    %v423 = vld [vmem:[#allocation8 + $0x1c] sm:$0xf]
    %v424 = vld [vmem:[#allocation8 + $0x20] sm:$0xf]
    %v425 = vld [vmem:[#allocation8 + $0x24] sm:$0xf]
    %v426 = vld [vmem:[#allocation8 + $0x28] sm:$0xf]
    %v427 = vld [vmem:[#allocation8 + $0x2c] sm:$0xf]
    %v428 = vld [vmem:[#allocation8 + $0x30] sm:$0xf]
    %v429 = vld [vmem:[#allocation8 + $0x34] sm:$0xf]
    %v430 = vld [vmem:[#allocation8 + $0x38] sm:$0xf]
    %v431 = vld [vmem:[#allocation8 + $0x3c] sm:$0xf]
    %v432 = vld [vmem:[#allocation11] sm:$0x1]
    %v434 = vperm.slane %v432, 0
    %v452 = vunpack.c.l.b16 %v416
    %v453 = vunpack.c.l.b16 %v417
    %v454 = vunpack.c.l.b16 %v418
    %v455 = vunpack.c.l.b16 %v419
    %v456 = vunpack.c.l.b16 %v420
    %v457 = vunpack.c.l.b16 %v421
    %v458 = vunpack.c.l.b16 %v422
    %v459 = vunpack.c.l.b16 %v423
    %v460 = vunpack.c.l.b16 %v424
    %v461 = vunpack.c.l.b16 %v425
    %v462 = vunpack.c.l.b16 %v426
    %v463 = vunpack.c.l.b16 %v427
    %v464 = vunpack.c.l.b16 %v428
    %v465 = vunpack.c.l.b16 %v429
    %v466 = vunpack.c.l.b16 %v430
    %v467 = vunpack.c.l.b16 %v431
    %v468 = vpack.c.b16 %v453, %v452
    %v469 = vpack.c.b16 %v455, %v454
    %v470 = vpack.c.b16 %v457, %v456
    %v471 = vpack.c.b16 %v459, %v458
    %v472 = vpack.c.b16 %v461, %v460
    %v473 = vpack.c.b16 %v463, %v462
    %v474 = vpack.c.b16 %v465, %v464
    %v475 = vpack.c.b16 %v467, %v466
    %484 = vmatpush.bf16.msra.mxu0 %v475
    %485 = vmatpush.bf16.msra.mxu0 %v474
    %486 = vmatpush.bf16.msra.mxu0 %v473
    %487 = vmatpush.bf16.msra.mxu0 %v472
    %488 = vmatpush.bf16.msra.mxu0 %v471
    %489 = vmatpush.bf16.msra.mxu0 %v470
    %490 = vmatpush.bf16.msra.mxu0 %v469
    %491 = vmatpush.bf16.msra.mxu0 %v468
    %492 = vmatmul.bf16.gmra.mxu0 %v415
    %v493 = vpop.f32.mrf.mxu0
    %v494 = vadd.f32 %v434, %v493
    %v495 = vpop.f32.mrf.mxu0
    %496 = vdwg.mxu0
    %497 = vst [vmem:[#allocation13] sm:$0xff] %v494
    // Predicated region
    $region50: #{decoder_forward.1} parent=1 // pred_check
      _
    $region51: #{decoder_forward.1} parent=1 // pred_check_branch
      %499 = sbr.rel (0) target = $region53
    $region52: #{decoder_forward.1} parent=1 // pred_region
      %501 = vsyncadd [#allocation4], 0
      %s503 = sshll.u32 [#allocation13], 4
      %s504 = int_to_ptr.vmem [resolvable:$true] %s503
      %s505 = sshll.u32 %s6, 4
      %s506 = int_to_ptr.hbm [resolvable:$true] %s505
      %508 = dma.vmem_to_hbm [thread:$0]  %s504, 128, %s506, [#allocation4]
    $region53: #{decoder_forward.1} parent=1 // pred_fallthru
      _
    // Predicated region
    $region54: #{decoder_forward.1} parent=1 // pred_check
      _
    $region55: #{decoder_forward.1} parent=1 // pred_check_branch
      %510 = sbr.rel (0) target = $region57
    $region56: #{decoder_forward.1} parent=1 // pred_region
      %512 = dma.done [#allocation4], 128
    $region57: #{decoder_forward.1} parent=1 // pred_fallthru
      _
    %513 = vsyncpa [#allocation3], 1
    %514 = vsyncpa [#allocation6], 1
    %515 = vsyncpa [#allocation9], 1
    %516 = vsyncpa [#allocation12], 1
    %517 = vsyncpa [#allocation4], 1

</llo_original>
